<compile_context>
chip_gen: v5e
topology: v5e:2x2
jax: 0.10.0
libtpu: 0.0.40
codegen_flags: <defaults>
</compile_context>

<pallas_src>
import math

import jax
import jax.numpy as jnp
from jax import lax
from jax.experimental import pallas as pl
from jax.experimental.pallas import tpu as pltpu

_LOG_LO = math.log(1e-4)
_LOG_HI = math.log(1.0 - 1e-4)


# ----------------------------------------------------------------------------
# Kernel 1: CenterNet penalty-reduced focal loss — tiled parallel grid,
#           per-block partials, no wrapper padding.
# ----------------------------------------------------------------------------
def _make_focal_kernel(total_rows, block_rows, ragged):
    def kernel(logit_ref, gt_ref, out_ref):
        x = logit_ref[...].astype(jnp.float32)
        gt = gt_ref[...].astype(jnp.float32)

        # log sigma(x) = -softplus(-x) ; log(1 - sigma(x)) = -x - softplus(-x)
        # -> one exp + one log1p per element.  The 1e-4 clamp of `_sigmoid` is
        # applied through the hoisted lo/hi masks.
        e = jnp.exp(jnp.clip(-x, -30.0, 30.0))
        log1pe = jnp.log1p(e)
        pred_raw = pl.reciprocal(1.0 + e, approx=True)          # sigmoid(x), EUP
        lo = pred_raw < 1e-4
        hi = pred_raw > 1.0 - 1e-4
        pred = jnp.where(lo, 1e-4, jnp.where(hi, 1.0 - 1e-4, pred_raw))
        log_p = jnp.where(lo, _LOG_LO, jnp.where(hi, _LOG_HI, -log1pe))
        log_1mp = jnp.where(hi, _LOG_LO, jnp.where(lo, _LOG_HI, -x - log1pe))

        one_m_pred = 1.0 - pred
        pos_term = log_p * one_m_pred * one_m_pred
        neg_w = 1.0 - gt
        neg_w2 = neg_w * neg_w
        neg_term = log_1mp * pred * pred * (neg_w2 * neg_w2)

        is_pos = gt == 1.0
        is_neg = gt < 1.0
        if ragged:
            # Mask the rows of the last (partial) block that fall past B*C.
            rows = (pl.program_id(0) * block_rows
                    + lax.broadcasted_iota(jnp.int32, x.shape, 0))
            valid = rows < total_rows
            is_pos = jnp.logical_and(is_pos, valid)
            is_neg = jnp.logical_and(is_neg, valid)

        pos_sum = jnp.sum(jnp.where(is_pos, pos_term, 0.0))
        neg_sum = jnp.sum(jnp.where(is_neg, neg_term, 0.0))
        num_pos = jnp.sum(jnp.where(is_pos, 1.0, 0.0))

        # Per-block partials: lane0=pos_sum, lane1=neg_sum, lane2=num_pos.
        lane = lax.broadcasted_iota(jnp.int32, (1, 8, 128), 2)
        out_ref[...] = jnp.where(lane == 0, pos_sum,
                       jnp.where(lane == 1, neg_sum,
                       jnp.where(lane == 2, num_pos, 0.0)))
    return kernel


def _focal_block_rows(R, HW, x_item, g_item):
    # Per block row: double-buffered input tiles for both operands plus ~8
    # block-sized f32 intermediates the compiler keeps live in VMEM.
    per_row = HW * ((x_item + g_item) * 2 + 8 * 4)
    budget = 24 * 1024 * 1024
    rows = max(8, min(budget // max(per_row, 1), 1024))
    rows = (rows // 8) * 8
    rows = min(rows, pl.cdiv(R, 8) * 8)
    # Prefer >= 2 blocks so the "parallel" grid axis can split across the two
    # v7x TensorCores.
    if pl.cdiv(R, rows) < 2 and R > 8:
        rows = max(8, pl.cdiv(pl.cdiv(R, 2), 8) * 8)
    return int(rows)


def focal_loss(hm_logits, hm_gt):
    """FocalLoss(_sigmoid(logits), gt) as a row-tiled Pallas reduction."""
    B, C, H, W = hm_logits.shape
    R, HW = B * C, H * W
    x = hm_logits.reshape(R, HW)      # contiguous view, native dtype (no copy)
    g = hm_gt.reshape(R, HW)

    xi, gi = x.dtype.itemsize, g.dtype.itemsize
    block_rows = _focal_block_rows(R, HW, xi, gi)
    n_blocks = int(pl.cdiv(R, block_rows))
    ragged = (R % block_rows) != 0

    block_bytes = block_rows * HW * ((xi + gi) * 2 + 8 * 4)
    vmem_limit = int(min(48 << 20, max(24 << 20, block_bytes + (2 << 20))))

    partials = pl.pallas_call(
        _make_focal_kernel(R, block_rows, ragged),
        out_shape=jax.ShapeDtypeStruct((n_blocks, 8, 128), jnp.float32),
        grid_spec=pltpu.PrefetchScalarGridSpec(
            num_scalar_prefetch=0,
            grid=(n_blocks,),
            in_specs=[pl.BlockSpec((block_rows, HW), lambda i: (i, 0)),
                      pl.BlockSpec((block_rows, HW), lambda i: (i, 0))],
            out_specs=pl.BlockSpec((1, 8, 128), lambda i: (i, 0, 0))),
        compiler_params=pltpu.CompilerParams(
            dimension_semantics=("parallel",),
            vmem_limit_bytes=vmem_limit),
        cost_estimate=pl.CostEstimate(
            flops=16 * R * HW,
            transcendentals=3 * R * HW,
            bytes_accessed=R * HW * (xi + gi) + n_blocks * 8 * 128 * 4),
    )(x, g)

    sums = jnp.sum(partials, axis=0)          # (8, 128)
    pos_sum, neg_sum, num_pos = sums[0, 0], sums[0, 1], sums[0, 2]
    return jnp.where(num_pos == 0.0, -neg_sum,
                     -(pos_sum + neg_sum) / jnp.maximum(num_pos, 1.0))


# ----------------------------------------------------------------------------
# Kernel 2: fused RegL1 (wh + off) — bulk per-batch feature DMA via BlockSpec,
#           in-kernel one-hot MXU gather, parallel grid over the batch.
# ----------------------------------------------------------------------------
def _make_reg_kernel(HW, K, c_wh):
    def kernel(ind_ref, mask_ref, tgt_ref, feat_ref, out_ref):
        # ind_ref:  (1, 1, K) int32   mask_ref: (1, 1, K) f32
        # tgt_ref:  (1, C, K) f32     feat_ref: (1, C, HW) feature dtype
        feat = feat_ref[0].astype(jnp.float32)                      # (C, HW)
        idx = ind_ref[0]                                            # (1, K)

        # Exact gather of the K needed columns via a one-hot MXU matmul.
        onehot = (lax.broadcasted_iota(jnp.int32, (HW, K), 0)
                  == idx).astype(jnp.float32)                       # (HW, K)
        pred = jnp.dot(feat, onehot,
                       preferred_element_type=jnp.float32,
                       precision=lax.Precision.HIGHEST)             # (C, K)

        m = mask_ref[0]                                             # (1, K)
        diff = jnp.abs(pred * m - tgt_ref[0] * m)                   # (C, K)
        chan = lax.broadcasted_iota(jnp.int32, diff.shape, 0)
        wh_num = jnp.sum(jnp.where(chan < c_wh, diff, 0.0))
        off_num = jnp.sum(jnp.where(chan >= c_wh, diff, 0.0))
        mask_sum = jnp.sum(m)

        # Per-batch partials: lane0=wh_num, lane1=off_num, lane2=mask_sum.
        lane = lax.broadcasted_iota(jnp.int32, (1, 8, 128), 2)
        out_ref[...] = jnp.where(lane == 0, wh_num,
                       jnp.where(lane == 1, off_num,
                       jnp.where(lane == 2, mask_sum, 0.0)))
    return kernel


def fused_reg_l1_loss(wh_feat, off_feat, reg_mask, ind, wh_target, off_target):
    """Both RegL1 losses (wh + reg offset) in a single pallas_call."""
    B, Cw, H, W = wh_feat.shape
    Co = off_feat.shape[1]
    C = Cw + Co
    K = ind.shape[1]
    HW = H * W

    # Single channel-concatenated feature slab (B, C, HW); stays NCHW-contiguous.
    feat = jnp.concatenate([wh_feat, off_feat], axis=1).reshape(B, C, HW)
    # Targets re-laid channels-major with K on the lane dimension: (B, C, K).
    tgt = jnp.concatenate(
        [jnp.transpose(wh_target.astype(jnp.float32), (0, 2, 1)),
         jnp.transpose(off_target.astype(jnp.float32), (0, 2, 1))], axis=1)
    ind3 = ind.astype(jnp.int32).reshape(B, 1, K)
    mask3 = reg_mask.astype(jnp.float32).reshape(B, 1, K)

    feat_bytes = 2 * C * HW * feat.dtype.itemsize        # double-buffered slab
    gather_bytes = 2 * HW * K * 4                        # one-hot + iota temps
    vmem_limit = int(min(48 << 20,
                         max(24 << 20, feat_bytes + gather_bytes + (4 << 20))))

    partials = pl.pallas_call(
        _make_reg_kernel(HW, K, Cw),
        out_shape=jax.ShapeDtypeStruct((B, 8, 128), jnp.float32),
        grid_spec=pltpu.PrefetchScalarGridSpec(
            num_scalar_prefetch=0,
            grid=(B,),
            in_specs=[
                pl.BlockSpec((1, 1, K), lambda b: (b, 0, 0)),   # ind
                pl.BlockSpec((1, 1, K), lambda b: (b, 0, 0)),   # reg_mask
                pl.BlockSpec((1, C, K), lambda b: (b, 0, 0)),   # targets
                pl.BlockSpec((1, C, HW), lambda b: (b, 0, 0)),  # features (bulk DMA)
            ],
            out_specs=pl.BlockSpec((1, 8, 128), lambda b: (b, 0, 0))),
        compiler_params=pltpu.CompilerParams(
            dimension_semantics=("parallel",),
            vmem_limit_bytes=vmem_limit),
        cost_estimate=pl.CostEstimate(
            flops=2 * B * C * HW * K + 4 * B * HW * K,
            transcendentals=0,
            bytes_accessed=B * C * HW * feat.dtype.itemsize),
    )(ind3, mask3, tgt, feat)

    sums = jnp.sum(partials, axis=0)                      # (8, 128)
    wh_num, off_num, mask_sum = sums[0, 0], sums[0, 1], sums[0, 2]
    wh_loss = wh_num / (Cw * mask_sum + 1e-4)
    off_loss = off_num / (Co * mask_sum + 1e-4)
    return wh_loss, off_loss


# ----------------------------------------------------------------------------
# CenterNetLoss forward (defaults: focal + RegL1, reg_offset=True, 1 stack)
# ----------------------------------------------------------------------------
def centernet_loss(outputs, batch, *, num_stacks=1, hm_weight=1.0,
                   wh_weight=0.1, off_weight=0.01):
    hm_loss = jnp.float32(0.0)
    wh_loss = jnp.float32(0.0)
    off_loss = jnp.float32(0.0)
    for s in range(num_stacks):
        output = outputs[s]
        hm_loss += focal_loss(output['hm'], batch['hm']) / num_stacks
        if wh_weight > 0 or off_weight > 0:
            wh_l, off_l = fused_reg_l1_loss(
                output['wh'], output['reg'], batch['reg_mask'],
                batch['ind'], batch['wh'], batch['reg'])
            if wh_weight > 0:
                wh_loss += wh_l / num_stacks
            if off_weight > 0:
                off_loss += off_l / num_stacks
    return {
        'hm_loss': hm_weight * hm_loss,
        'wh_loss': wh_weight * wh_loss,
        'off_loss': off_weight * off_loss,
    }


# ----------------------------------------------------------------------------
# Pure-JAX reference for verification
# ----------------------------------------------------------------------------
def _ref_focal(logits, gt):
    pred = jnp.clip(jax.nn.sigmoid(logits.astype(jnp.float32)), 1e-4, 1 - 1e-4)
    gt = gt.astype(jnp.float32)
    pos = (gt == 1.0).astype(jnp.float32)
    neg = (gt < 1.0).astype(jnp.float32)
    neg_w = (1.0 - gt) ** 4
    pos_loss = jnp.log(pred) * (1.0 - pred) ** 2 * pos
    neg_loss = jnp.log(1.0 - pred) * pred ** 2 * neg_w * neg
    num_pos = pos.sum()
    return jnp.where(num_pos == 0.0, -neg_loss.sum(),
                     -(pos_loss.sum() + neg_loss.sum()) / jnp.maximum(num_pos, 1.0))


def _ref_reg_l1(feat, mask, ind, target):
    B, C, H, W = feat.shape
    K = ind.shape[1]
    f = jnp.transpose(feat, (0, 2, 3, 1)).reshape(B, H * W, C).astype(jnp.float32)
    idx = jnp.broadcast_to(ind[:, :, None].astype(jnp.int32), (B, K, C))
    pred = jnp.take_along_axis(f, idx, axis=1)
    m_e = jnp.broadcast_to(mask.astype(jnp.float32)[:, :, None], (B, K, C))
    num = jnp.sum(jnp.abs(pred * m_e - target.astype(jnp.float32) * m_e))
    return num / (jnp.sum(m_e) + 1e-4)


if __name__ == "__main__":
    key = jax.random.PRNGKey(0)
    B, NUM_CLASSES, H, W, K = 2, 16, 16, 16, 8

    ks = jax.random.split(key, 8)
    hm_out = jax.random.normal(ks[0], (B, NUM_CLASSES, H, W), jnp.float32)
    wh_out = jax.random.normal(ks[1], (B, 2, H, W), jnp.float32)
    reg_out = jax.random.normal(ks[2], (B, 2, H, W), jnp.float32)

    # Ground-truth heatmap in [0, 0.9) with a few exact-1 peaks.
    hm_gt = jax.random.uniform(ks[3], (B, NUM_CLASSES, H, W), jnp.float32) * 0.9
    hm_gt = hm_gt.at[0, 1, 3, 5].set(1.0)
    hm_gt = hm_gt.at[1, 2, 10, 7].set(1.0)
    hm_gt = hm_gt.at[1, 0, 6, 12].set(1.0)

    ind = jax.random.randint(ks[4], (B, K), 0, H * W, jnp.int32)
    reg_mask = (jnp.arange(K)[None, :] < jnp.array([[5], [3]])).astype(jnp.float32)
    wh_gt = jax.random.uniform(ks[5], (B, K, 2), jnp.float32) * 10.0
    reg_gt = jax.random.uniform(ks[6], (B, K, 2), jnp.float32)

    outputs = [{'hm': hm_out, 'wh': wh_out, 'reg': reg_out}]
    batch = {'hm': hm_gt, 'reg_mask': reg_mask, 'ind': ind,
             'wh': wh_gt, 'reg': reg_gt}

    losses = centernet_loss(outputs, batch)
    losses = jax.block_until_ready(losses)

    # Verify against a pure-JAX reference of the PyTorch semantics.
    ref = {
        'hm_loss': 1.0 * _ref_focal(hm_out, hm_gt),
        'wh_loss': 0.1 * _ref_reg_l1(wh_out, reg_mask, ind, wh_gt),
        'off_loss': 0.01 * _ref_reg_l1(reg_out, reg_mask, ind, reg_gt),
    }
    for name in ('hm_loss', 'wh_loss', 'off_loss'):
        got, want = float(losses[name]), float(ref[name])
        assert abs(got - want) <= 2e-3 * max(1.0, abs(want)), (name, got, want)

    print("KERNEL_OK")
</pallas_src>

<mosaic_0001>
module attributes {stable_mosaic.version = 11 : i64} {
  func.func @kernel(%arg0: i32, %arg1: memref<16x256xf32, #tpu.memory_space<vmem>>, %arg2: memref<16x256xf32, #tpu.memory_space<vmem>>, %arg3: memref<1x8x128xf32, #tpu.memory_space<vmem>>) attributes {dimension_semantics = [#tpu.dimension_semantics<parallel>], iteration_bounds = array<i64: 2>, scalar_prefetch = 0 : i64, scratch_operands = 0 : i64, tpu.core_type = #tpu.core_type<tc>, window_params = [{transform_indices = @transform_0, window_bounds = array<i64: 16, 256>}, {transform_indices = @transform_1, window_bounds = array<i64: 16, 256>}, {transform_indices = @transform_2, window_bounds = array<i64: 1, 8, 128>}]} {
    %c0 = arith.constant 0 : index
    %c0_0 = arith.constant 0 : index
    %0 = vector.load %arg1[%c0, %c0_0] : memref<16x256xf32, #tpu.memory_space<vmem>>, vector<16x256xf32>
    %c0_1 = arith.constant 0 : index
    %c0_2 = arith.constant 0 : index
    %1 = vector.load %arg2[%c0_1, %c0_2] : memref<16x256xf32, #tpu.memory_space<vmem>>, vector<16x256xf32>
    %cst = arith.constant 0.000000e+00 : f32
    %2 = vector.broadcast %cst : f32 to vector<16x256xf32>
    %3 = arith.subf %2, %0 : vector<16x256xf32>
    %cst_3 = arith.constant -3.000000e+01 : f32
    %cst_4 = arith.constant 3.000000e+01 : f32
    %4 = vector.broadcast %cst_3 : f32 to vector<16x256xf32>
    %5 = arith.maximumf %4, %3 : vector<16x256xf32>
    %6 = vector.broadcast %cst_4 : f32 to vector<16x256xf32>
    %7 = arith.minimumf %6, %5 : vector<16x256xf32>
    %8 = math.exp %7 : vector<16x256xf32>
    %9 = math.log1p %8 : vector<16x256xf32>
    %cst_5 = arith.constant 1.000000e+00 : f32
    %10 = vector.broadcast %cst_5 : f32 to vector<16x256xf32>
    %11 = arith.addf %10, %8 : vector<16x256xf32>
    %12 = tpu.reciprocal %11 {approx = true} : vector<16x256xf32> -> vector<16x256xf32>
    %cst_6 = arith.constant 9.99999974E-5 : f32
    %13 = vector.broadcast %cst_6 : f32 to vector<16x256xf32>
    %14 = arith.cmpf olt, %12, %13 : vector<16x256xf32>
    %cst_7 = arith.constant 0.999899983 : f32
    %15 = vector.broadcast %cst_7 : f32 to vector<16x256xf32>
    %16 = arith.cmpf ogt, %12, %15 : vector<16x256xf32>
    %cst_8 = arith.constant 0.999899983 : f32
    %17 = vector.broadcast %cst_8 : f32 to vector<16x256xf32>
    %18 = arith.select %16, %17, %12 : vector<16x256xi1>, vector<16x256xf32>
    %cst_9 = arith.constant 9.99999974E-5 : f32
    %19 = vector.broadcast %cst_9 : f32 to vector<16x256xf32>
    %20 = arith.select %14, %19, %18 : vector<16x256xi1>, vector<16x256xf32>
    %cst_10 = arith.constant 0.000000e+00 : f32
    %21 = vector.broadcast %cst_10 : f32 to vector<16x256xf32>
    %22 = arith.subf %21, %9 : vector<16x256xf32>
    %cst_11 = arith.constant -1.000050e-04 : f32
    %23 = vector.broadcast %cst_11 : f32 to vector<16x256xf32>
    %24 = arith.select %16, %23, %22 : vector<16x256xi1>, vector<16x256xf32>
    %cst_12 = arith.constant -9.21034049 : f32
    %25 = vector.broadcast %cst_12 : f32 to vector<16x256xf32>
    %26 = arith.select %14, %25, %24 : vector<16x256xi1>, vector<16x256xf32>
    %cst_13 = arith.constant 0.000000e+00 : f32
    %27 = vector.broadcast %cst_13 : f32 to vector<16x256xf32>
    %28 = arith.subf %27, %0 : vector<16x256xf32>
    %29 = arith.subf %28, %9 : vector<16x256xf32>
    %cst_14 = arith.constant -1.000050e-04 : f32
    %30 = vector.broadcast %cst_14 : f32 to vector<16x256xf32>
    %31 = arith.select %14, %30, %29 : vector<16x256xi1>, vector<16x256xf32>
    %cst_15 = arith.constant -9.21034049 : f32
    %32 = vector.broadcast %cst_15 : f32 to vector<16x256xf32>
    %33 = arith.select %16, %32, %31 : vector<16x256xi1>, vector<16x256xf32>
    %cst_16 = arith.constant 1.000000e+00 : f32
    %34 = vector.broadcast %cst_16 : f32 to vector<16x256xf32>
    %35 = arith.subf %34, %20 : vector<16x256xf32>
    %36 = arith.mulf %26, %35 : vector<16x256xf32>
    %37 = arith.mulf %36, %35 : vector<16x256xf32>
    %cst_17 = arith.constant 1.000000e+00 : f32
    %38 = vector.broadcast %cst_17 : f32 to vector<16x256xf32>
    %39 = arith.subf %38, %1 : vector<16x256xf32>
    %40 = arith.mulf %39, %39 : vector<16x256xf32>
    %41 = arith.mulf %33, %20 : vector<16x256xf32>
    %42 = arith.mulf %41, %20 : vector<16x256xf32>
    %43 = arith.mulf %40, %40 : vector<16x256xf32>
    %44 = arith.mulf %42, %43 : vector<16x256xf32>
    %cst_18 = arith.constant 1.000000e+00 : f32
    %45 = vector.broadcast %cst_18 : f32 to vector<16x256xf32>
    %46 = arith.cmpf oeq, %1, %45 : vector<16x256xf32>
    %cst_19 = arith.constant 1.000000e+00 : f32
    %47 = vector.broadcast %cst_19 : f32 to vector<16x256xf32>
    %48 = arith.cmpf olt, %1, %47 : vector<16x256xf32>
    %cst_20 = arith.constant 0.000000e+00 : f32
    %49 = vector.broadcast %cst_20 : f32 to vector<16x256xf32>
    %50 = arith.select %46, %37, %49 : vector<16x256xi1>, vector<16x256xf32>
    %51 = vector.shape_cast %50 : vector<16x256xf32> to vector<1x16x256xf32>
    %cst_21 = arith.constant dense<0.000000e+00> : vector<1xf32>
    %52 = vector.multi_reduction <add>, %51, %cst_21 [1, 2] : vector<1x16x256xf32> to vector<1xf32>
    %53 = vector.shape_cast %52 : vector<1xf32> to vector<1x1x1xf32>
    %54 = vector.extract %53[0, 0, 0] : f32 from vector<1x1x1xf32>
    %cst_22 = arith.constant 0.000000e+00 : f32
    %55 = vector.broadcast %cst_22 : f32 to vector<16x256xf32>
    %56 = arith.select %48, %44, %55 : vector<16x256xi1>, vector<16x256xf32>
    %57 = vector.shape_cast %56 : vector<16x256xf32> to vector<1x16x256xf32>
    %cst_23 = arith.constant dense<0.000000e+00> : vector<1xf32>
    %58 = vector.multi_reduction <add>, %57, %cst_23 [1, 2] : vector<1x16x256xf32> to vector<1xf32>
    %59 = vector.shape_cast %58 : vector<1xf32> to vector<1x1x1xf32>
    %60 = vector.extract %59[0, 0, 0] : f32 from vector<1x1x1xf32>
    %cst_24 = arith.constant 1.000000e+00 : f32
    %cst_25 = arith.constant 0.000000e+00 : f32
    %61 = vector.broadcast %cst_24 : f32 to vector<16x256xf32>
    %62 = vector.broadcast %cst_25 : f32 to vector<16x256xf32>
    %63 = arith.select %46, %61, %62 : vector<16x256xi1>, vector<16x256xf32>
    %64 = vector.shape_cast %63 : vector<16x256xf32> to vector<1x16x256xf32>
    %cst_26 = arith.constant dense<0.000000e+00> : vector<1xf32>
    %65 = vector.multi_reduction <add>, %64, %cst_26 [1, 2] : vector<1x16x256xf32> to vector<1xf32>
    %66 = vector.shape_cast %65 : vector<1xf32> to vector<1x1x1xf32>
    %67 = vector.extract %66[0, 0, 0] : f32 from vector<1x1x1xf32>
    %68 = tpu.iota {dimensions = array<i32: 2>} : vector<1x8x128xi32>
    %c0_i32 = arith.constant 0 : i32
    %69 = vector.broadcast %c0_i32 : i32 to vector<1x8x128xi32>
    %70 = arith.cmpi eq, %68, %69 : vector<1x8x128xi32>
    %c1_i32 = arith.constant 1 : i32
    %71 = vector.broadcast %c1_i32 : i32 to vector<1x8x128xi32>
    %72 = arith.cmpi eq, %68, %71 : vector<1x8x128xi32>
    %c2_i32 = arith.constant 2 : i32
    %73 = vector.broadcast %c2_i32 : i32 to vector<1x8x128xi32>
    %74 = arith.cmpi eq, %68, %73 : vector<1x8x128xi32>
    %cst_27 = arith.constant 0.000000e+00 : f32
    %75 = vector.broadcast %67 : f32 to vector<1x8x128xf32>
    %76 = vector.broadcast %cst_27 : f32 to vector<1x8x128xf32>
    %77 = arith.select %74, %75, %76 : vector<1x8x128xi1>, vector<1x8x128xf32>
    %78 = vector.broadcast %60 : f32 to vector<1x8x128xf32>
    %79 = arith.select %72, %78, %77 : vector<1x8x128xi1>, vector<1x8x128xf32>
    %80 = vector.broadcast %54 : f32 to vector<1x8x128xf32>
    %81 = arith.select %70, %80, %79 : vector<1x8x128xi1>, vector<1x8x128xf32>
    %c0_28 = arith.constant 0 : index
    %c0_29 = arith.constant 0 : index
    %c0_30 = arith.constant 0 : index
    %82 = vector.load %arg3[%c0_28, %c0_29, %c0_30] : memref<1x8x128xf32, #tpu.memory_space<vmem>>, vector<1x8x128xf32>
    tpu.vector_store %arg3[%c0_28, %c0_29, %c0_30], %81 {strides = array<i32>} : memref<1x8x128xf32, #tpu.memory_space<vmem>>, vector<1x8x128xf32>,
    return
  }
  func.func @transform_0(%arg0: i32) -> (i32, i32) {
    %c0_i32 = arith.constant 0 : i32
    %c0_i32_0 = arith.constant 0 : i32
    return %arg0, %c0_i32 : i32, i32
  }
  func.func @transform_1(%arg0: i32) -> (i32, i32) {
    %c0_i32 = arith.constant 0 : i32
    %c0_i32_0 = arith.constant 0 : i32
    return %arg0, %c0_i32 : i32, i32
  }
  func.func @transform_2(%arg0: i32) -> (i32, i32, i32) {
    %c0_i32 = arith.constant 0 : i32
    %c0_i32_0 = arith.constant 0 : i32
    %c0_i32_1 = arith.constant 0 : i32
    return %arg0, %c0_i32, %c0_i32_0 : i32, i32, i32
  }
}

</mosaic_0001>

<llo_original>
// kernel: tpu_custom_call.1
$region0: #{tpu_custom_call.1}
  #allocation0 [shape = 'u32[]', space=smem, size = 0x4, offset = 0x4, fixed_abs, tag = 'smem constant byte address 0x4 - core index']
  #allocation1 [shape = 'u32[72,128]{1,0:T(1,128)}', space=vmem, size = 0x9000, scoped, tag = 'internal scratch']
  %s0 = inlined_call_operand.hbm [shape: f32[32,256], index: 0, kind: input, shape index: {}]
  %s1 = inlined_call_operand.hbm [shape: f32[32,256], index: 1, kind: input, shape index: {}]
  %s2 = inlined_call_operand.hbm [shape: f32[2,8,128], index: 2, kind: output, shape index: {}]
  %s3 = sld [smem:[#allocation0]]
  $region49: #{tpu_custom_call.1} parent=0
    _
  %s5 = ssub.s32 1, %s3
  %s6 = scalar_select 0, %s5, %s3
  $region1: #{tpu_custom_call.1} parent=0
    #allocation2 [shape = 'u8[32768]{0}', space=vmem, size = 0x8000, scoped, tag = 'input window, operand 0']
    #allocation3 [shape = 's32[2]{0}', space=sflag, size = 0x8, scoped, tag = 'scoped memory for tpu_custom_call.1']
    #allocation4 [shape = 's32[2]{0}', space=sflag, size = 0x8, scoped, tag = 'scoped memory for tpu_custom_call.1']
    #allocation5 [shape = 'u8[32768]{0}', space=vmem, size = 0x8000, scoped, tag = 'input window, operand 1']
    #allocation6 [shape = 's32[2]{0}', space=sflag, size = 0x8, scoped, tag = 'scoped memory for tpu_custom_call.1']
    #allocation7 [shape = 'u8[8192]{0}', space=vmem, size = 0x2000, scoped, tag = 'output window, operand 0']
    %7 = vsyncpa [#allocation3], 0
    %s8 = scalar_lea.sflag [#allocation3], 1
    %9 = vsyncpa %s8, 0
    %10 = vsyncpa [#allocation6], 0
    %s11 = scalar_lea.sflag [#allocation6], 1
    %12 = vsyncpa %s11, 0
    %13 = vsyncpa [#allocation4], 0
    %s14 = scalar_lea.sflag [#allocation4], 1
    %15 = vsyncpa %s14, 0
    loop: start=0, step=1, limit=4
    $region2: #{tpu_custom_call.1} parent=1 // loop_pre_header
      _
    $region3: #{tpu_custom_call.1} parent=1 // loop_header
      %s17 = sphi 0, %s21
      %p18 = scmp.ge.s32.totalorder %s17, 4
      %s27 = sphi 0, %s29
      %s30 = sphi 0, %s27
      %s31 = sphi 0, %s30
      %s47 = sphi 0, %s31
      %s53 = sphi 0, %s55
      %s56 = sphi 0, %s53
      %s57 = sphi 0, %s56
      %s73 = sphi 0, %s57
      %s79 = sphi 0, %s81
      %s82 = sphi 0, %s79
      %s83 = sphi 0, %s82
      %s99 = sphi 0, %s83
    $region4: #{tpu_custom_call.1} parent=1 // loop_header_branch
      %20 = sbr.rel (%p18) target = $region8
    $region5: #{tpu_custom_call.1} parent=1 // loop_body
      %s22 = ssub.s32 %s17, 1
      %s23 = ssub.s32 %s17, 2
      %s24 = sadd.s32 %s17, 1
      %s25 = ssub.s32 %s17, %s24
      %p26 = scmp.eq.s32.totalorder %s25, 0
      %s28 = sadd.s32 %s27, 1
      %s29 = scalar_select %p26, %s27, %s28
      %p32 = pneg %p26
      %p33 = scmp.eq.s32.totalorder %s17, 1
      %p34 = por %p32, %p33
      %p35 = scmp.ne.s32.totalorder %s27, %s30
      %p36 = scmp.eq.s32.totalorder %s17, 0
      %p37 = por %p35, %p36
      %p38 = scmp.ne.s32.totalorder %s27, %s30
      %p39 = scmp.eq.s32.totalorder %s22, 1
      %p40 = por %p38, %p39
      %p41 = scmp.ne.s32.totalorder %s30, %s31
      %p42 = scmp.eq.s32.totalorder %s22, 0
      %p43 = por %p41, %p42
      %p44 = scmp.ne.s32.totalorder %s30, %s31
      %p45 = scmp.eq.s32.totalorder %s23, 1
      %p46 = por %p44, %p45
      %p48 = scmp.ne.s32.totalorder %s31, %s47
      %p49 = scmp.eq.s32.totalorder %s23, 0
      %p50 = por %p48, %p49
      %s51 = ssub.s32 %s17, %s24
      %p52 = scmp.eq.s32.totalorder %s51, 0
      %s54 = sadd.s32 %s53, 1
      %s55 = scalar_select %p52, %s53, %s54
      %p58 = pneg %p52
      %p59 = scmp.eq.s32.totalorder %s17, 1
      %p60 = por %p58, %p59
      %p61 = scmp.ne.s32.totalorder %s53, %s56
      %p62 = scmp.eq.s32.totalorder %s17, 0
      %p63 = por %p61, %p62
      %p64 = scmp.ne.s32.totalorder %s53, %s56
      %p65 = scmp.eq.s32.totalorder %s22, 1
      %p66 = por %p64, %p65
      %p67 = scmp.ne.s32.totalorder %s56, %s57
      %p68 = scmp.eq.s32.totalorder %s22, 0
      %p69 = por %p67, %p68
      %p70 = scmp.ne.s32.totalorder %s56, %s57
      %p71 = scmp.eq.s32.totalorder %s23, 1
      %p72 = por %p70, %p71
      %p74 = scmp.ne.s32.totalorder %s57, %s73
      %p75 = scmp.eq.s32.totalorder %s23, 0
      %p76 = por %p74, %p75
      %s77 = ssub.s32 %s17, %s24
      %p78 = scmp.eq.s32.totalorder %s77, 0
      %s80 = sadd.s32 %s79, 1
      %s81 = scalar_select %p78, %s79, %s80
      %p84 = pneg %p78
      %p85 = scmp.eq.s32.totalorder %s17, 1
      %p86 = por %p84, %p85
      %p87 = scmp.ne.s32.totalorder %s79, %s82
      %p88 = scmp.eq.s32.totalorder %s17, 0
      %p89 = por %p87, %p88
      %p90 = scmp.ne.s32.totalorder %s79, %s82
      %p91 = scmp.eq.s32.totalorder %s22, 1
      %p92 = por %p90, %p91
      %p93 = scmp.ne.s32.totalorder %s82, %s83
      %p94 = scmp.eq.s32.totalorder %s22, 0
      %p95 = por %p93, %p94
      %p96 = scmp.ne.s32.totalorder %s82, %s83
      %p97 = scmp.eq.s32.totalorder %s23, 1
      %p98 = por %p96, %p97
      %p100 = scmp.ne.s32.totalorder %s83, %s99
      %p101 = scmp.eq.s32.totalorder %s23, 0
      %p102 = por %p100, %p101
      %p103 = scmp.le.s32.totalorder 1, %s17
      %p104 = scmp.lt.s32.totalorder %s17, 3
      %p105 = pnand %p103, %p104
      %p106 = pneg %p105
      // Predicated region
      $region9: #{tpu_custom_call.1} parent=5 // pred_check
        _
      $region10: #{tpu_custom_call.1} parent=5 // pred_check_branch
        %108 = sbr.rel (%p105) target = $region12
      $region11: #{tpu_custom_call.1} parent=5 // pred_region
        %s109 = ssub.s32 %s17, 1
      $region12: #{tpu_custom_call.1} parent=5 // pred_fallthru
        _
      %p110 = scmp.lt.s32.totalorder %s17, 2
      // Predicated region
      $region13: #{tpu_custom_call.1} parent=5 // pred_check
        %p111 = pneg %p110
      $region14: #{tpu_custom_call.1} parent=5 // pred_check_branch
        %113 = sbr.rel (%p111) target = $region16
      $region15: #{tpu_custom_call.1} parent=5 // pred_region
        // Predicated region
        $region17: #{tpu_custom_call.1} parent=15 // pred_check
          %p114 = pneg %p37
        $region18: #{tpu_custom_call.1} parent=15 // pred_check_branch
          %116 = sbr.rel (%p114) target = $region20
        $region19: #{tpu_custom_call.1} parent=15 // pred_region
          %s117 = sand.u32 %s27, 1
          %s118 = scalar_lea.sflag [#allocation3], %s117
          %s119 = sand.u32 %s27, 1
          %s120 = smul.addr %s119, 32
          %s121 = scalar_lea.vmem [#allocation2], %s120
          %s122 = smul.u32 2, %s17
          %124 = vsyncadd %s118, 0
          %s125 = smul.addr %s122, 2
          %s126 = smul.addr %s125, 8
          %s127 = scalar_lea.hbm %s0, %s126
          %s128 = sshll.u32 %s127, 4
          %s129 = int_to_ptr.hbm [resolvable:$true] %s128
          %s130 = sshll.u32 %s121, 4
          %s131 = int_to_ptr.vmem [resolvable:$true] %s130
          %136 = dma.hbm_to_vmem [thread:$0]  %s129, 512, %s131, %s118, 256, 256, 16
        $region20: #{tpu_custom_call.1} parent=15 // pred_fallthru
          _
        // Predicated region
        $region21: #{tpu_custom_call.1} parent=15 // pred_check
          %p137 = pneg %p63
        $region22: #{tpu_custom_call.1} parent=15 // pred_check_branch
          %139 = sbr.rel (%p137) target = $region24
        $region23: #{tpu_custom_call.1} parent=15 // pred_region
          %s140 = sand.u32 %s53, 1
          %s141 = scalar_lea.sflag [#allocation6], %s140
          %s142 = sand.u32 %s53, 1
          %s143 = smul.addr %s142, 32
          %s144 = scalar_lea.vmem [#allocation5], %s143
          %s145 = smul.u32 2, %s17
          %147 = vsyncadd %s141, 0
          %s148 = smul.addr %s145, 2
          %s149 = smul.addr %s148, 8
          %s150 = scalar_lea.hbm %s1, %s149
          %s151 = sshll.u32 %s150, 4
          %s152 = int_to_ptr.hbm [resolvable:$true] %s151
          %s153 = sshll.u32 %s144, 4
          %s154 = int_to_ptr.vmem [resolvable:$true] %s153
          %159 = dma.hbm_to_vmem [thread:$0]  %s152, 512, %s154, %s141, 256, 256, 16
        $region24: #{tpu_custom_call.1} parent=15 // pred_fallthru
          _
      $region16: #{tpu_custom_call.1} parent=5 // pred_fallthru
        _
      %p160 = scmp.le.s32.totalorder 1, %s17
      %p161 = scmp.lt.s32.totalorder %s17, 3
      %p162 = pnand %p160, %p161
      %p163 = pneg %p162
      // Predicated region
      $region25: #{tpu_custom_call.1} parent=5 // pred_check
        _
      $region26: #{tpu_custom_call.1} parent=5 // pred_check_branch
        %165 = sbr.rel (%p162) target = $region28
      $region27: #{tpu_custom_call.1} parent=5 // pred_region
        %s166 = ssub.s32 %s17, 1
        %s167 = sand.u32 %s30, 1
        %s168 = scalar_lea.sflag [#allocation3], %s167
        %s169 = sand.u32 %s30, 1
        %s170 = smul.addr %s169, 32
        %s171 = scalar_lea.vmem [#allocation2], %s170
        // Predicated region
        $region29: #{tpu_custom_call.1} parent=27 // pred_check
          %p172 = pneg %p43
        $region30: #{tpu_custom_call.1} parent=27 // pred_check_branch
          %174 = sbr.rel (%p172) target = $region32
        $region31: #{tpu_custom_call.1} parent=27 // pred_region
          %176 = dma.done %s168, 512
        $region32: #{tpu_custom_call.1} parent=27 // pred_fallthru
          _
        %s177 = sand.u32 %s56, 1
        %s178 = scalar_lea.sflag [#allocation6], %s177
        %s179 = sand.u32 %s56, 1
        %s180 = smul.addr %s179, 32
        %s181 = scalar_lea.vmem [#allocation5], %s180
        // Predicated region
        $region33: #{tpu_custom_call.1} parent=27 // pred_check
          %p182 = pneg %p69
        $region34: #{tpu_custom_call.1} parent=27 // pred_check_branch
          %184 = sbr.rel (%p182) target = $region36
        $region35: #{tpu_custom_call.1} parent=27 // pred_region
          %186 = dma.done %s178, 512
        $region36: #{tpu_custom_call.1} parent=27 // pred_fallthru
          _
        %s187 = sand.u32 %s30, 1
        %s188 = scalar_lea.sflag [#allocation3], %s187
        %s189 = sand.u32 %s30, 1
        %s190 = smul.addr %s189, 32
        %s191 = scalar_lea.vmem [#allocation2], %s190
        %p192 = pneg %p43
        %p193 = pneg %p40
        %s194 = sand.u32 %s56, 1
        %s195 = scalar_lea.sflag [#allocation6], %s194
        %s196 = sand.u32 %s56, 1
        %s197 = smul.addr %s196, 32
        %s198 = scalar_lea.vmem [#allocation5], %s197
        %p199 = pneg %p69
        %p200 = pneg %p66
        %p201 = pneg %p95
        %p202 = pneg %p92
        %s203 = sand.u32 %s82, 1
        %s204 = scalar_lea.sflag [#allocation4], %s203
        %s205 = sand.u32 %s82, 1
        %s206 = smul.addr %s205, 8
        %s207 = scalar_lea.vmem [#allocation7], %s206
        %s208 = smul.u32 2, %s22
        %s209 = smul.u32 2, %s22
        %v210 = vld [vmem:[%s171] sm:$0xff]
        %v211 = vld [vmem:[%s171 + $0x8] sm:$0xff]
        %v212 = vld [vmem:[%s171 + $0x10] sm:$0xff]
        %v213 = vld [vmem:[%s171 + $0x18] sm:$0xff]
        %v214 = vld [vmem:[%s181] sm:$0xff]
        %v215 = vld [vmem:[%s181 + $0x8] sm:$0xff]
        %v216 = vld [vmem:[%s181 + $0x10] sm:$0xff]
        %v217 = vld [vmem:[%s181 + $0x18] sm:$0xff]
        %v218 = vsub.f32 0.0, %v210
        %v219 = vsub.f32 0.0, %v211
        %v220 = vsub.f32 0.0, %v212
        %v221 = vsub.f32 0.0, %v213
        %v222 = vmax.f32 %v218, -30.0
        %v223 = vmax.f32 %v219, -30.0
        %v224 = vmax.f32 %v220, -30.0
        %v225 = vmax.f32 %v221, -30.0
        %v226 = vmin.f32 %v222, 30.0
        %v227 = vmin.f32 %v223, 30.0
        %v228 = vmin.f32 %v224, 30.0
        %v229 = vmin.f32 %v225, 30.0
        %v230 = vmul.f32 %v226, 1.442695
        %v231 = vpow.pop %v230
        %v232 = vmul.f32 %v227, 1.442695
        %v233 = vpow.pop %v232
        %v234 = vmul.f32 %v228, 1.442695
        %v235 = vpow.pop %v234
        %v236 = vmul.f32 %v229, 1.442695
        %v237 = vpow.pop %v236
        %v238 = vadd.f32 %v231, 1.0
        %v239 = vlog2.pop %v238
        %v240 = vmul.f32 %v239, 0.6931472
        %v241 = vmul.f32 -0.5, %v231
        %v242 = vadd.f32 %v241, 1.0
        %v243 = vmul.f32 %v242, %v231
        %v244 = vand.u32 2147483647, %v231
        %vm245 = vcmp.lt.f32.partialorder %v244, 0.0004427343
        %v246 = vsel %vm245, %v243, %v240
        %v247 = vadd.f32 %v233, 1.0
        %v248 = vlog2.pop %v247
        %v249 = vmul.f32 %v248, 0.6931472
        %v250 = vmul.f32 -0.5, %v233
        %v251 = vadd.f32 %v250, 1.0
        %v252 = vmul.f32 %v251, %v233
        %v253 = vand.u32 2147483647, %v233
        %vm254 = vcmp.lt.f32.partialorder %v253, 0.0004427343
        %v255 = vsel %vm254, %v252, %v249
        %v256 = vadd.f32 %v235, 1.0
        %v257 = vlog2.pop %v256
        %v258 = vmul.f32 %v257, 0.6931472
        %v259 = vmul.f32 -0.5, %v235
        %v260 = vadd.f32 %v259, 1.0
        %v261 = vmul.f32 %v260, %v235
        %v262 = vand.u32 2147483647, %v235
        %vm263 = vcmp.lt.f32.partialorder %v262, 0.0004427343
        %v264 = vsel %vm263, %v261, %v258
        %v265 = vadd.f32 %v237, 1.0
        %v266 = vlog2.pop %v265
        %v267 = vmul.f32 %v266, 0.6931472
        %v268 = vmul.f32 -0.5, %v237
        %v269 = vadd.f32 %v268, 1.0
        %v270 = vmul.f32 %v269, %v237
        %v271 = vand.u32 2147483647, %v237
        %vm272 = vcmp.lt.f32.partialorder %v271, 0.0004427343
        %v273 = vsel %vm272, %v270, %v267
        %v274 = vadd.f32 %v231, 1.0
        %v275 = vadd.f32 %v233, 1.0
        %v276 = vadd.f32 %v235, 1.0
        %v277 = vadd.f32 %v237, 1.0
        %v278 = vrcp.pop %v274
        %v279 = vrcp.pop %v275
        %v280 = vrcp.pop %v276
        %v281 = vrcp.pop %v277
        %vm282 = vcmp.lt.f32.partialorder %v278, 0.0001
        %vm283 = vcmp.lt.f32.partialorder %v279, 0.0001
        %vm284 = vcmp.lt.f32.partialorder %v280, 0.0001
        %vm285 = vcmp.lt.f32.partialorder %v281, 0.0001
        %vm286 = vcmp.gt.f32.partialorder %v278, 0.9999
        %vm287 = vcmp.gt.f32.partialorder %v279, 0.9999
        %vm288 = vcmp.gt.f32.partialorder %v280, 0.9999
        %vm289 = vcmp.gt.f32.partialorder %v281, 0.9999
        %v290 = vsel %vm286, 0.9999, %v278
        %v291 = vsel %vm287, 0.9999, %v279
        %v292 = vsel %vm288, 0.9999, %v280
        %v293 = vsel %vm289, 0.9999, %v281
        %v294 = vsel %vm282, 0.0001, %v290
        %v295 = vsel %vm283, 0.0001, %v291
        %v296 = vsel %vm284, 0.0001, %v292
        %v297 = vsel %vm285, 0.0001, %v293
        %v298 = vsub.f32 0.0, %v246
        %v299 = vsub.f32 0.0, %v255
        %v300 = vsub.f32 0.0, %v264
        %v301 = vsub.f32 0.0, %v273
        %v302 = vsel %vm286, -0.000100005, %v298
        %v303 = vsel %vm287, -0.000100005, %v299
        %v304 = vsel %vm288, -0.000100005, %v300
        %v305 = vsel %vm289, -0.000100005, %v301
        %v306 = vsel %vm282, -9.2103405, %v302
        %v307 = vsel %vm283, -9.2103405, %v303
        %v308 = vsel %vm284, -9.2103405, %v304
        %v309 = vsel %vm285, -9.2103405, %v305
        %v310 = vsub.f32 %v218, %v246
        %v311 = vsub.f32 %v219, %v255
        %v312 = vsub.f32 %v220, %v264
        %v313 = vsub.f32 %v221, %v273
        %v314 = vsel %vm282, -0.000100005, %v310
        %v315 = vsel %vm283, -0.000100005, %v311
        %v316 = vsel %vm284, -0.000100005, %v312
        %v317 = vsel %vm285, -0.000100005, %v313
        %v318 = vsel %vm286, -9.2103405, %v314
        %v319 = vsel %vm287, -9.2103405, %v315
        %v320 = vsel %vm288, -9.2103405, %v316
        %v321 = vsel %vm289, -9.2103405, %v317
        %v322 = vsub.f32 1.0, %v294
        %v323 = vsub.f32 1.0, %v295
        %v324 = vsub.f32 1.0, %v296
        %v325 = vsub.f32 1.0, %v297
        %v326 = vmul.f32 %v306, %v322
        %v327 = vmul.f32 %v307, %v323
        %v328 = vmul.f32 %v308, %v324
        %v329 = vmul.f32 %v309, %v325
        %v330 = vmul.f32 %v326, %v322
        %v331 = vmul.f32 %v327, %v323
        %v332 = vmul.f32 %v328, %v324
        %v333 = vmul.f32 %v329, %v325
        %v334 = vsub.f32 1.0, %v214
        %v335 = vsub.f32 1.0, %v215
        %v336 = vsub.f32 1.0, %v216
        %v337 = vsub.f32 1.0, %v217
        %v338 = vmul.f32 %v334, %v334
        %v339 = vmul.f32 %v335, %v335
        %v340 = vmul.f32 %v336, %v336
        %v341 = vmul.f32 %v337, %v337
        %v342 = vmul.f32 %v318, %v294
        %v343 = vmul.f32 %v319, %v295
        %v344 = vmul.f32 %v320, %v296
        %v345 = vmul.f32 %v321, %v297
        %v346 = vmul.f32 %v342, %v294
        %v347 = vmul.f32 %v343, %v295
        %v348 = vmul.f32 %v344, %v296
        %v349 = vmul.f32 %v345, %v297
        %v350 = vmul.f32 %v338, %v338
        %v351 = vmul.f32 %v339, %v339
        %v352 = vmul.f32 %v340, %v340
        %v353 = vmul.f32 %v341, %v341
        %v354 = vmul.f32 %v346, %v350
        %v355 = vmul.f32 %v347, %v351
        %v356 = vmul.f32 %v348, %v352
        %v357 = vmul.f32 %v349, %v353
        %vm358 = vcmp.eq.f32.partialorder %v214, 1.0
        %vm359 = vcmp.eq.f32.partialorder %v215, 1.0
        %vm360 = vcmp.eq.f32.partialorder %v216, 1.0
        %vm361 = vcmp.eq.f32.partialorder %v217, 1.0
        %vm362 = vcmp.lt.f32.partialorder %v214, 1.0
        %vm363 = vcmp.lt.f32.partialorder %v215, 1.0
        %vm364 = vcmp.lt.f32.partialorder %v216, 1.0
        %vm365 = vcmp.lt.f32.partialorder %v217, 1.0
        %v366 = vsel %vm358, %v330, 0.0
        %v367 = vsel %vm359, %v331, 0.0
        %v368 = vsel %vm360, %v332, 0.0
        %v369 = vsel %vm361, %v333, 0.0
        %v370 = vadd.f32 %v366, %v367
        %v371 = vadd.f32 %v370, %v368
        %v372 = vadd.f32 %v371, %v369
        %373 = vadd.xlane.f32.xlu0 %v372
        %v374 = vpop.xlane.xlu0 %373
        %v375 = vrot.slane %v374, 4
        %v376 = vadd.f32 %v374, %v375
        %v377 = vrot.slane %v376, 2
        %v378 = vadd.f32 %v376, %v377
        %v379 = vrot.slane %v378, 1
        %v380 = vadd.f32 %v378, %v379
        %s381 = vtos %v380
        %v382 = vsel %vm362, %v354, 0.0
        %v383 = vsel %vm363, %v355, 0.0
        %v384 = vsel %vm364, %v356, 0.0
        %v385 = vsel %vm365, %v357, 0.0
        %v386 = vadd.f32 %v382, %v383
        %v387 = vadd.f32 %v386, %v384
        %v388 = vadd.f32 %v387, %v385
        %389 = vadd.xlane.f32.xlu0 %v388
        %v390 = vpop.xlane.xlu0 %389
        %v391 = vrot.slane %v390, 4
        %v392 = vadd.f32 %v390, %v391
        %v393 = vrot.slane %v392, 2
        %v394 = vadd.f32 %v392, %v393
        %v395 = vrot.slane %v394, 1
        %v396 = vadd.f32 %v394, %v395
        %s397 = vtos %v396
        %v398 = vsel %vm358, 1.0, 0.0
        %v399 = vsel %vm359, 1.0, 0.0
        %v400 = vsel %vm360, 1.0, 0.0
        %v401 = vsel %vm361, 1.0, 0.0
        %v402 = vadd.f32 %v398, %v399
        %v403 = vadd.f32 %v402, %v400
        %v404 = vadd.f32 %v403, %v401
        %405 = vadd.xlane.f32.xlu0 %v404
        %v406 = vpop.xlane.xlu0 %405
        %v407 = vrot.slane %v406, 4
        %v408 = vadd.f32 %v406, %v407
        %v409 = vrot.slane %v408, 2
        %v410 = vadd.f32 %v408, %v409
        %v411 = vrot.slane %v410, 1
        %v412 = vadd.f32 %v410, %v411
        %s413 = vtos %v412
        %v414 = vlaneseq
        %v415 = vand.u32 %v414, 127
        %vm416 = vcmp.eq.s32.totalorder %v415, 0
        %vm417 = vcmp.eq.s32.totalorder %v415, 1
        %vm418 = vcmp.eq.s32.totalorder %v415, 2
        %v419 = vstv %s413
        %v420 = vsel %vm418, %v419, 0.0
        %v421 = vstv %s397
        %v422 = vsel %vm417, %v421, %v420
        %v423 = vstv %s381
        %v424 = vsel %vm416, %v423, %v422
        %425 = vst [vmem:[%s207] sm:$0xff] %v424
        %s426 = sand.u32 %s82, 1
        %s427 = scalar_lea.sflag [#allocation4], %s426
        %s428 = sand.u32 %s82, 1
        %s429 = smul.addr %s428, 8
        %s430 = scalar_lea.vmem [#allocation7], %s429
        // Predicated region
        $region37: #{tpu_custom_call.1} parent=27 // pred_check
          %p431 = pneg %p92
        $region38: #{tpu_custom_call.1} parent=27 // pred_check_branch
          %433 = sbr.rel (%p431) target = $region40
        $region39: #{tpu_custom_call.1} parent=27 // pred_region
          %435 = vsyncadd %s427, 0
          %s436 = smul.addr %s22, 8
          %s437 = scalar_lea.hbm %s2, %s436
          %s439 = sshll.u32 %s430, 4
          %s440 = int_to_ptr.vmem [resolvable:$true] %s439
          %s441 = sshll.u32 %s437, 4
          %s442 = int_to_ptr.hbm [resolvable:$true] %s441
          %444 = dma.vmem_to_hbm [thread:$0]  %s440, 128, %s442, %s427
        $region40: #{tpu_custom_call.1} parent=27 // pred_fallthru
          _
      $region28: #{tpu_custom_call.1} parent=5 // pred_fallthru
        _
      %p445 = scmp.le.s32.totalorder 2, %s17
      // Predicated region
      $region41: #{tpu_custom_call.1} parent=5 // pred_check
        %p446 = pneg %p445
      $region42: #{tpu_custom_call.1} parent=5 // pred_check_branch
        %448 = sbr.rel (%p446) target = $region44
      $region43: #{tpu_custom_call.1} parent=5 // pred_region
        %s449 = ssub.s32 %s17, 2
        // Predicated region
        $region45: #{tpu_custom_call.1} parent=43 // pred_check
          %p450 = pneg %p98
        $region46: #{tpu_custom_call.1} parent=43 // pred_check_branch
          %452 = sbr.rel (%p450) target = $region48
        $region47: #{tpu_custom_call.1} parent=43 // pred_region
          %s453 = sand.u32 %s83, 1
          %s454 = scalar_lea.sflag [#allocation4], %s453
          %s455 = sand.u32 %s83, 1
          %s456 = smul.addr %s455, 8
          %s457 = scalar_lea.vmem [#allocation7], %s456
          %459 = dma.done %s454, 128
        $region48: #{tpu_custom_call.1} parent=43 // pred_fallthru
          _
      $region44: #{tpu_custom_call.1} parent=5 // pred_fallthru
        _
    $region6: #{tpu_custom_call.1} parent=1 // loop_footer
      %s21 = sadd.s32 1, %s17
    $region7: #{tpu_custom_call.1} parent=1 // loop_footer_branch
      %16 = sbr.rel target = $region3
    $region8: #{tpu_custom_call.1} parent=1 // loop_exit
      _
    %460 = vsyncpa [#allocation3], 1
    %s461 = scalar_lea.sflag [#allocation3], 1
    %462 = vsyncpa %s461, 1
    %463 = vsyncpa [#allocation6], 1
    %s464 = scalar_lea.sflag [#allocation6], 1
    %465 = vsyncpa %s464, 1
    %466 = vsyncpa [#allocation4], 1
    %s467 = scalar_lea.sflag [#allocation4], 1
    %468 = vsyncpa %s467, 1

</llo_original>
